<compile_context>
chip_gen: v7x
topology: tpu7x:2x2x1
jax: 0.10.0
libtpu: 0.0.40
codegen_flags: <defaults>
</compile_context>

<pallas_src>
import jax
import jax.numpy as jnp
from jax.experimental import pallas as pl
from jax.experimental.pallas import tpu as pltpu

INPUT_SIZE = 30
N_OUT = 2
HIDDEN = (64, 32, 16)


def _round_up(x, m):
    return ((x + m - 1) // m) * m


def _choose_tile(B, tile_b):
    """Largest multiple-of-8 tile <= tile_b that keeps tail padding <= ~12.5%."""
    tb = min(tile_b, _round_up(max(B, 1), 8))
    tb = max(8, _round_up(tb, 8))
    while tb > 256:
        pad = _round_up(B, tb) - B
        if pad * 8 <= B:            # padding <= 12.5% of real rows
            break
        tb = max(8, _round_up(tb // 2, 8))
    return tb


def cancer_mlp_kernel(x_ref,
                      w1_ref, b1_ref,
                      w2_ref, b2_ref,
                      w3_ref, b3_ref,
                      w4_ref, b4_ref,
                      o_ref):
    # Cast the streamed f32 batch tile to bf16 in-kernel (hidden under DMA).
    x = x_ref[...].astype(jnp.bfloat16)

    # Layer 1: (tb,30)bf16 @ (30,64)bf16 -> f32 acc; bias+ReLU in f32.
    h = jnp.dot(x, w1_ref[...], preferred_element_type=jnp.float32)
    h = jnp.maximum(h + b1_ref[...], 0.0).astype(jnp.bfloat16)
    # Dropout(0.3) -> identity in eval/inference mode.

    # Layer 2: (tb,64) @ (64,32)
    h = jnp.dot(h, w2_ref[...], preferred_element_type=jnp.float32)
    h = jnp.maximum(h + b2_ref[...], 0.0).astype(jnp.bfloat16)
    # Dropout(0.3) -> identity in eval/inference mode.

    # Layer 3: (tb,32) @ (32,16)
    h = jnp.dot(h, w3_ref[...], preferred_element_type=jnp.float32)
    h = jnp.maximum(h + b3_ref[...], 0.0).astype(jnp.bfloat16)

    # Layer 4 (logits): (tb,16) @ (16,2) -> narrow (tb,2) f32 store.
    out = jnp.dot(h, w4_ref[...], preferred_element_type=jnp.float32)
    o_ref[...] = (out + b4_ref[...]).astype(o_ref.dtype)


def cancer_nn_forward(x, kparams, *, tile_b=4096):
    """x: (B, 30) float32. kparams: kernel-ready params from prepare_params()."""
    B, F = x.shape

    tb = _choose_tile(B, tile_b)
    Bp = _round_up(B, tb)

    xp = x
    if Bp != B:
        xp = jnp.pad(x, ((0, Bp - B), (0, 0)))

    w1, b1 = kparams["w1"], kparams["b1"]
    w2, b2 = kparams["w2"], kparams["b2"]
    w3, b3 = kparams["w3"], kparams["b3"]
    w4, b4 = kparams["w4"], kparams["b4"]

    def resident_spec(a):
        # Constant block index across the batch grid -> fetched once, VMEM-resident.
        return pl.BlockSpec(a.shape, lambda i: (0, 0))

    flops = 2 * Bp * (F * HIDDEN[0] + HIDDEN[0] * HIDDEN[1]
                      + HIDDEN[1] * HIDDEN[2] + HIDDEN[2] * N_OUT)
    weight_bytes = sum(int(kparams[k].size) * kparams[k].dtype.itemsize
                       for k in kparams)
    bytes_accessed = Bp * (F * 4 + N_OUT * 4) + weight_bytes

    grid = (Bp // tb,)
    out = pl.pallas_call(
        cancer_mlp_kernel,
        out_shape=jax.ShapeDtypeStruct((Bp, N_OUT), jnp.float32),
        grid=grid,
        in_specs=[
            pl.BlockSpec((tb, F), lambda i: (i, 0)),   # x: streamed per batch tile
            resident_spec(w1), resident_spec(b1),
            resident_spec(w2), resident_spec(b2),
            resident_spec(w3), resident_spec(b3),
            resident_spec(w4), resident_spec(b4),
        ],
        out_specs=pl.BlockSpec((tb, N_OUT), lambda i: (i, 0)),
        compiler_params=pltpu.CompilerParams(
            dimension_semantics=("parallel",),
            vmem_limit_bytes=32 * 1024 * 1024),
        cost_estimate=pl.CostEstimate(
            flops=flops, transcendentals=0, bytes_accessed=bytes_accessed),
    )(xp, w1, b1, w2, b2, w3, b3, w4, b4)

    return out[:B]


def init_params(key, input_size=INPUT_SIZE):
    """Deterministic init mirroring CancerNN's Linear shapes.

    PyTorch stores Linear weights as (out, in); we keep them transposed (in, out)
    so the kernel does x @ W directly. Biases are (1, out) to stay lane-aligned.
    """
    sizes = [(input_size, HIDDEN[0]), (HIDDEN[0], HIDDEN[1]),
             (HIDDEN[1], HIDDEN[2]), (HIDDEN[2], N_OUT)]
    params = {}
    for i, (fan_in, fan_out) in enumerate(sizes, start=1):
        key, kw, kb = jax.random.split(key, 3)
        bound = 1.0 / jnp.sqrt(fan_in)
        params[f"w{i}"] = jax.random.uniform(
            kw, (fan_in, fan_out), jnp.float32, minval=-bound, maxval=bound)
        params[f"b{i}"] = jax.random.uniform(
            kb, (1, fan_out), jnp.float32, minval=-bound, maxval=bound)
    return params


def prepare_params(params):
    """Weights to bf16 (MXU dtype); biases stay f32. No lane padding needed."""
    kp = {}
    for i in (1, 2, 3, 4):
        kp[f"w{i}"] = params[f"w{i}"].astype(jnp.bfloat16)
        kp[f"b{i}"] = params[f"b{i}"].astype(jnp.float32)
    return kp


def reference_forward(x, kparams):
    """Pure-JAX reference mirroring the kernel's bf16/f32 mixed precision."""
    h = x.astype(jnp.bfloat16)
    h = jnp.dot(h, kparams["w1"], preferred_element_type=jnp.float32) + kparams["b1"]
    h = jnp.maximum(h, 0.0).astype(jnp.bfloat16)
    h = jnp.dot(h, kparams["w2"], preferred_element_type=jnp.float32) + kparams["b2"]
    h = jnp.maximum(h, 0.0).astype(jnp.bfloat16)
    h = jnp.dot(h, kparams["w3"], preferred_element_type=jnp.float32) + kparams["b3"]
    h = jnp.maximum(h, 0.0).astype(jnp.bfloat16)
    out = jnp.dot(h, kparams["w4"], preferred_element_type=jnp.float32) + kparams["b4"]
    return out


if __name__ == "__main__":
    key = jax.random.PRNGKey(0)
    key, kx1, kx2 = jax.random.split(key, 3)

    params = init_params(key, INPUT_SIZE)
    kparams = prepare_params(params)

    # Small batch (single grid step).
    B1 = 8
    x1 = jax.random.normal(kx1, (B1, INPUT_SIZE), jnp.float32)
    out1 = jax.block_until_ready(cancer_nn_forward(x1, kparams))
    ref1 = reference_forward(x1, kparams)
    assert out1.shape == (B1, N_OUT), out1.shape
    assert jnp.allclose(out1, ref1, atol=2e-3, rtol=2e-3), "mismatch vs reference (B=8)"

    # Larger batch not divisible by the tile -> multi-step grid + tail padding.
    B2 = 300
    x2 = jax.random.normal(kx2, (B2, INPUT_SIZE), jnp.float32)
    out2 = jax.block_until_ready(cancer_nn_forward(x2, kparams, tile_b=128))
    ref2 = reference_forward(x2, kparams)
    assert out2.shape == (B2, N_OUT), out2.shape
    assert jnp.allclose(out2, ref2, atol=2e-3, rtol=2e-3), "mismatch vs reference (B=300)"

    print("KERNEL_OK")
</pallas_src>

<mosaic_0001>
module attributes {stable_mosaic.version = 11 : i64} {
  func.func @cancer_mlp_kernel(%arg0: i32, %arg1: memref<8x30xf32, #tpu.memory_space<vmem>>, %arg2: memref<30x64xbf16, #tpu.memory_space<vmem>>, %arg3: memref<1x64xf32, #tpu.memory_space<vmem>>, %arg4: memref<64x32xbf16, #tpu.memory_space<vmem>>, %arg5: memref<1x32xf32, #tpu.memory_space<vmem>>, %arg6: memref<32x16xbf16, #tpu.memory_space<vmem>>, %arg7: memref<1x16xf32, #tpu.memory_space<vmem>>, %arg8: memref<16x2xbf16, #tpu.memory_space<vmem>>, %arg9: memref<1x2xf32, #tpu.memory_space<vmem>>, %arg10: memref<8x2xf32, #tpu.memory_space<vmem>>) attributes {dimension_semantics = [#tpu.dimension_semantics<parallel>], iteration_bounds = array<i64: 1>, scalar_prefetch = 0 : i64, scratch_operands = 0 : i64, tpu.core_type = #tpu.core_type<tc>, window_params = [{transform_indices = @transform_0, window_bounds = array<i64: 8, 30>}, {pipeline_mode = #tpu.pipeline_mode<synchronous>, transform_indices = @transform_1, window_bounds = array<i64: 30, 64>}, {pipeline_mode = #tpu.pipeline_mode<synchronous>, transform_indices = @transform_2, window_bounds = array<i64: 1, 64>}, {pipeline_mode = #tpu.pipeline_mode<synchronous>, transform_indices = @transform_3, window_bounds = array<i64: 64, 32>}, {pipeline_mode = #tpu.pipeline_mode<synchronous>, transform_indices = @transform_4, window_bounds = array<i64: 1, 32>}, {pipeline_mode = #tpu.pipeline_mode<synchronous>, transform_indices = @transform_5, window_bounds = array<i64: 32, 16>}, {pipeline_mode = #tpu.pipeline_mode<synchronous>, transform_indices = @transform_6, window_bounds = array<i64: 1, 16>}, {pipeline_mode = #tpu.pipeline_mode<synchronous>, transform_indices = @transform_7, window_bounds = array<i64: 16, 2>}, {pipeline_mode = #tpu.pipeline_mode<synchronous>, transform_indices = @transform_8, window_bounds = array<i64: 1, 2>}, {transform_indices = @transform_9, window_bounds = array<i64: 8, 2>}]} {
    %c0 = arith.constant 0 : index
    %c0_0 = arith.constant 0 : index
    %0 = vector.load %arg1[%c0, %c0_0] : memref<8x30xf32, #tpu.memory_space<vmem>>, vector<8x30xf32>
    %1 = arith.truncf %0 : vector<8x30xf32> to vector<8x30xbf16>
    %c0_1 = arith.constant 0 : index
    %c0_2 = arith.constant 0 : index
    %2 = vector.load %arg2[%c0_1, %c0_2] : memref<30x64xbf16, #tpu.memory_space<vmem>>, vector<30x64xbf16>
    %cst = arith.constant dense<0.000000e+00> : vector<8x64xf32>
    %3 = tpu.matmul %1, %2, %cst {dimension_numbers = #tpu.dot_dimension_numbers<[1], [0], [0], [1], [0, 0, 1, 1], [], []>} : vector<8x30xbf16>, vector<30x64xbf16>, vector<8x64xf32> -> vector<8x64xf32>
    %c0_3 = arith.constant 0 : index
    %c0_4 = arith.constant 0 : index
    %4 = vector.load %arg3[%c0_3, %c0_4] : memref<1x64xf32, #tpu.memory_space<vmem>>, vector<1x64xf32>
    %5 = vector.broadcast %4 : vector<1x64xf32> to vector<8x64xf32>
    %6 = arith.addf %3, %5 : vector<8x64xf32>
    %cst_5 = arith.constant 0.000000e+00 : f32
    %7 = vector.broadcast %cst_5 : f32 to vector<8x64xf32>
    %8 = arith.maximumf %6, %7 : vector<8x64xf32>
    %9 = arith.truncf %8 : vector<8x64xf32> to vector<8x64xbf16>
    %c0_6 = arith.constant 0 : index
    %c0_7 = arith.constant 0 : index
    %10 = vector.load %arg4[%c0_6, %c0_7] : memref<64x32xbf16, #tpu.memory_space<vmem>>, vector<64x32xbf16>
    %cst_8 = arith.constant dense<0.000000e+00> : vector<8x32xf32>
    %11 = tpu.matmul %9, %10, %cst_8 {dimension_numbers = #tpu.dot_dimension_numbers<[1], [0], [0], [1], [0, 0, 1, 1], [], []>} : vector<8x64xbf16>, vector<64x32xbf16>, vector<8x32xf32> -> vector<8x32xf32>
    %c0_9 = arith.constant 0 : index
    %c0_10 = arith.constant 0 : index
    %12 = vector.load %arg5[%c0_9, %c0_10] : memref<1x32xf32, #tpu.memory_space<vmem>>, vector<1x32xf32>
    %13 = vector.broadcast %12 : vector<1x32xf32> to vector<8x32xf32>
    %14 = arith.addf %11, %13 : vector<8x32xf32>
    %cst_11 = arith.constant 0.000000e+00 : f32
    %15 = vector.broadcast %cst_11 : f32 to vector<8x32xf32>
    %16 = arith.maximumf %14, %15 : vector<8x32xf32>
    %17 = arith.truncf %16 : vector<8x32xf32> to vector<8x32xbf16>
    %c0_12 = arith.constant 0 : index
    %c0_13 = arith.constant 0 : index
    %18 = vector.load %arg6[%c0_12, %c0_13] : memref<32x16xbf16, #tpu.memory_space<vmem>>, vector<32x16xbf16>
    %cst_14 = arith.constant dense<0.000000e+00> : vector<8x16xf32>
    %19 = tpu.matmul %17, %18, %cst_14 {dimension_numbers = #tpu.dot_dimension_numbers<[1], [0], [0], [1], [0, 0, 1, 1], [], []>} : vector<8x32xbf16>, vector<32x16xbf16>, vector<8x16xf32> -> vector<8x16xf32>
    %c0_15 = arith.constant 0 : index
    %c0_16 = arith.constant 0 : index
    %20 = vector.load %arg7[%c0_15, %c0_16] : memref<1x16xf32, #tpu.memory_space<vmem>>, vector<1x16xf32>
    %21 = vector.broadcast %20 : vector<1x16xf32> to vector<8x16xf32>
    %22 = arith.addf %19, %21 : vector<8x16xf32>
    %cst_17 = arith.constant 0.000000e+00 : f32
    %23 = vector.broadcast %cst_17 : f32 to vector<8x16xf32>
    %24 = arith.maximumf %22, %23 : vector<8x16xf32>
    %25 = arith.truncf %24 : vector<8x16xf32> to vector<8x16xbf16>
    %c0_18 = arith.constant 0 : index
    %c0_19 = arith.constant 0 : index
    %26 = vector.load %arg8[%c0_18, %c0_19] : memref<16x2xbf16, #tpu.memory_space<vmem>>, vector<16x2xbf16>
    %cst_20 = arith.constant dense<0.000000e+00> : vector<8x2xf32>
    %27 = tpu.matmul %25, %26, %cst_20 {dimension_numbers = #tpu.dot_dimension_numbers<[1], [0], [0], [1], [0, 0, 1, 1], [], []>} : vector<8x16xbf16>, vector<16x2xbf16>, vector<8x2xf32> -> vector<8x2xf32>
    %c0_21 = arith.constant 0 : index
    %c0_22 = arith.constant 0 : index
    %28 = vector.load %arg9[%c0_21, %c0_22] : memref<1x2xf32, #tpu.memory_space<vmem>>, vector<1x2xf32>
    %29 = vector.broadcast %28 : vector<1x2xf32> to vector<8x2xf32>
    %30 = arith.addf %27, %29 : vector<8x2xf32>
    %c0_23 = arith.constant 0 : index
    %c0_24 = arith.constant 0 : index
    %31 = vector.load %arg10[%c0_23, %c0_24] : memref<8x2xf32, #tpu.memory_space<vmem>>, vector<8x2xf32>
    tpu.vector_store %arg10[%c0_23, %c0_24], %30 {strides = array<i32>} : memref<8x2xf32, #tpu.memory_space<vmem>>, vector<8x2xf32>,
    return
  }
  func.func @transform_0(%arg0: i32) -> (i32, i32) {
    %c0_i32 = arith.constant 0 : i32
    %c0_i32_0 = arith.constant 0 : i32
    return %arg0, %c0_i32 : i32, i32
  }
  func.func @transform_1(%arg0: i32) -> (i32, i32) {
    %c0_i32 = arith.constant 0 : i32
    %c0_i32_0 = arith.constant 0 : i32
    %c0_i32_1 = arith.constant 0 : i32
    return %c0_i32, %c0_i32_0 : i32, i32
  }
  func.func @transform_2(%arg0: i32) -> (i32, i32) {
    %c0_i32 = arith.constant 0 : i32
    %c0_i32_0 = arith.constant 0 : i32
    %c0_i32_1 = arith.constant 0 : i32
    return %c0_i32, %c0_i32_0 : i32, i32
  }
  func.func @transform_3(%arg0: i32) -> (i32, i32) {
    %c0_i32 = arith.constant 0 : i32
    %c0_i32_0 = arith.constant 0 : i32
    %c0_i32_1 = arith.constant 0 : i32
    return %c0_i32, %c0_i32_0 : i32, i32
  }
  func.func @transform_4(%arg0: i32) -> (i32, i32) {
    %c0_i32 = arith.constant 0 : i32
    %c0_i32_0 = arith.constant 0 : i32
    %c0_i32_1 = arith.constant 0 : i32
    return %c0_i32, %c0_i32_0 : i32, i32
  }
  func.func @transform_5(%arg0: i32) -> (i32, i32) {
    %c0_i32 = arith.constant 0 : i32
    %c0_i32_0 = arith.constant 0 : i32
    %c0_i32_1 = arith.constant 0 : i32
    return %c0_i32, %c0_i32_0 : i32, i32
  }
  func.func @transform_6(%arg0: i32) -> (i32, i32) {
    %c0_i32 = arith.constant 0 : i32
    %c0_i32_0 = arith.constant 0 : i32
    %c0_i32_1 = arith.constant 0 : i32
    return %c0_i32, %c0_i32_0 : i32, i32
  }
  func.func @transform_7(%arg0: i32) -> (i32, i32) {
    %c0_i32 = arith.constant 0 : i32
    %c0_i32_0 = arith.constant 0 : i32
    %c0_i32_1 = arith.constant 0 : i32
    return %c0_i32, %c0_i32_0 : i32, i32
  }
  func.func @transform_8(%arg0: i32) -> (i32, i32) {
    %c0_i32 = arith.constant 0 : i32
    %c0_i32_0 = arith.constant 0 : i32
    %c0_i32_1 = arith.constant 0 : i32
    return %c0_i32, %c0_i32_0 : i32, i32
  }
  func.func @transform_9(%arg0: i32) -> (i32, i32) {
    %c0_i32 = arith.constant 0 : i32
    %c0_i32_0 = arith.constant 0 : i32
    return %arg0, %c0_i32 : i32, i32
  }
}

</mosaic_0001>

<llo_original>
// kernel: tpu_custom_call.1
$region0: #{tpu_custom_call.1}
  #allocation0 [shape = 'u32[]', space=smem, size = 0x4, offset = 0x4, fixed_abs, tag = 'smem constant byte address 0x4 - core index']
  #allocation1 [shape = 'u32[144,128]{1,0:T(1,128)}', space=vmem, size = 0x12000, scoped, tag = 'internal scratch']
  %s0 = inlined_call_operand.vmem [shape: f32[8,30], index: 0, kind: input, shape index: {}]
  %s1 = inlined_call_operand.vmem [shape: bf16[30,64], index: 1, kind: input, shape index: {}]
  %s2 = inlined_call_operand.vmem [shape: f32[1,64], index: 2, kind: input, shape index: {}]
  %s3 = inlined_call_operand.vmem [shape: bf16[64,32], index: 3, kind: input, shape index: {}]
  %s4 = inlined_call_operand.vmem [shape: f32[1,32], index: 4, kind: input, shape index: {}]
  %s5 = inlined_call_operand.vmem [shape: bf16[32,16], index: 5, kind: input, shape index: {}]
  %s6 = inlined_call_operand.vmem [shape: f32[1,16], index: 6, kind: input, shape index: {}]
  %s7 = inlined_call_operand.vmem [shape: bf16[16,2], index: 7, kind: input, shape index: {}]
  %s8 = inlined_call_operand.vmem [shape: f32[1,2], index: 8, kind: input, shape index: {}]
  %s9 = inlined_call_operand.vmem [shape: f32[8,2], index: 9, kind: output, shape index: {}]
  %s10 = sld [smem:[#allocation0]]
  $region46: #{tpu_custom_call.1} parent=0
    _
  %s12 = ssub.s32 1, %s10
  %s13 = scalar_select 0, %s12, %s10
  // Predicated region
  $region2: #{tpu_custom_call.1} parent=0 // pred_check
    _
  $region3: #{tpu_custom_call.1} parent=0 // pred_check_branch
    %15 = sbr.rel (0) target = $region5
  $region4: #{tpu_custom_call.1} parent=0 // pred_region
    _
  $region5: #{tpu_custom_call.1} parent=0 // pred_fallthru
    _
  // Predicated region
  $region6: #{tpu_custom_call.1} parent=0 // pred_check
    _
  $region7: #{tpu_custom_call.1} parent=0 // pred_check_branch
    %17 = sbr.rel (0) target = $region9
  $region8: #{tpu_custom_call.1} parent=0 // pred_region
    _
  $region9: #{tpu_custom_call.1} parent=0 // pred_fallthru
    _
  // Predicated region
  $region10: #{tpu_custom_call.1} parent=0 // pred_check
    _
  $region11: #{tpu_custom_call.1} parent=0 // pred_check_branch
    %19 = sbr.rel (0) target = $region13
  $region12: #{tpu_custom_call.1} parent=0 // pred_region
    _
  $region13: #{tpu_custom_call.1} parent=0 // pred_fallthru
    _
  // Predicated region
  $region14: #{tpu_custom_call.1} parent=0 // pred_check
    _
  $region15: #{tpu_custom_call.1} parent=0 // pred_check_branch
    %21 = sbr.rel (0) target = $region17
  $region16: #{tpu_custom_call.1} parent=0 // pred_region
    _
  $region17: #{tpu_custom_call.1} parent=0 // pred_fallthru
    _
  // Predicated region
  $region18: #{tpu_custom_call.1} parent=0 // pred_check
    _
  $region19: #{tpu_custom_call.1} parent=0 // pred_check_branch
    %23 = sbr.rel (0) target = $region21
  $region20: #{tpu_custom_call.1} parent=0 // pred_region
    _
  $region21: #{tpu_custom_call.1} parent=0 // pred_fallthru
    _
  // Predicated region
  $region22: #{tpu_custom_call.1} parent=0 // pred_check
    _
  $region23: #{tpu_custom_call.1} parent=0 // pred_check_branch
    %25 = sbr.rel (0) target = $region25
  $region24: #{tpu_custom_call.1} parent=0 // pred_region
    _
  $region25: #{tpu_custom_call.1} parent=0 // pred_fallthru
    _
  // Predicated region
  $region26: #{tpu_custom_call.1} parent=0 // pred_check
    _
  $region27: #{tpu_custom_call.1} parent=0 // pred_check_branch
    %27 = sbr.rel (0) target = $region29
  $region28: #{tpu_custom_call.1} parent=0 // pred_region
    _
  $region29: #{tpu_custom_call.1} parent=0 // pred_fallthru
    _
  // Predicated region
  $region30: #{tpu_custom_call.1} parent=0 // pred_check
    _
  $region31: #{tpu_custom_call.1} parent=0 // pred_check_branch
    %29 = sbr.rel (0) target = $region33
  $region32: #{tpu_custom_call.1} parent=0 // pred_region
    _
  $region33: #{tpu_custom_call.1} parent=0 // pred_fallthru
    _
  // Predicated region
  $region34: #{tpu_custom_call.1} parent=0 // pred_check
    _
  $region35: #{tpu_custom_call.1} parent=0 // pred_check_branch
    %31 = sbr.rel (0) target = $region37
  $region36: #{tpu_custom_call.1} parent=0 // pred_region
    _
  $region37: #{tpu_custom_call.1} parent=0 // pred_fallthru
    _
  %v33 = vld [vmem:[%s0] sm:$0xff]
  %v34 = vpack.c.bf16 %v33, %v33
  %v35 = vld [vmem:[%s1] sm:$0xf]
  %v36 = vld [vmem:[%s1 + $0x4] sm:$0xf]
  %v37 = vld [vmem:[%s1 + $0x8] sm:$0xf]
  %v38 = vld [vmem:[%s1 + $0xc] sm:$0x7]
  %v39 = vld [vmem:[%s2] sm:$0x1]
  %v41 = vlaneseq
  %v42 = vshrl.u32 %v41, 7
  %v43 = vsub.s32 0, %v42
  %v44 = vrot.slane %v39, %v43
  %v50 = vunpack.c.l.b16 %v35
  %v51 = vunpack.c.l.b16 %v36
  %v52 = vunpack.c.l.b16 %v37
  %v53 = vunpack.c.l.b16 %v38
  %v54 = vpack.c.b16 %v51, %v50
  %v55 = vpack.c.b16 %v53, %v52
  %vm57 = vcmask 244736
  %v59 = vsel %vm57, %v34, 0
  %vm61 = vcmask 1046528
  %v63 = vsel %vm61, %v55, 0
  %65 = vmatprep.subr.bf16.mxu0 0
  %66 = vmatpush1.bf16.msra.mxu0 %v54
  %67 = vmatprep.subr.bf16.mxu0 0
  %68 = vmatpush1.bf16.msra.mxu0 %v63
  %69 = vmatprep.subr.bf16.mxu0 0
  %70 = vmatpush1.bf16.msra.mxu0 0
  %71 = vmatprep.subr.bf16.mxu0 0
  %72 = vmatpush1.bf16.msra.mxu0 0
  %73 = vmatprep.subr.bf16.mxu0 0
  %74 = vmatpush1.bf16.msra.mxu0 0
  %75 = vmatprep.subr.bf16.mxu0 0
  %76 = vmatpush1.bf16.msra.mxu0 0
  %77 = vmatprep.subr.bf16.mxu0 0
  %78 = vmatpush1.bf16.msra.mxu0 0
  %79 = vmatprep.subr.bf16.mxu0 0
  %80 = vmatpush1.bf16.msra.mxu0 0
  %81 = vmatprep.subr.bf16.mxu0 0
  %82 = vmatpush1.bf16.msra.mxu0 0
  %83 = vmatprep.subr.bf16.mxu0 0
  %84 = vmatpush1.bf16.msra.mxu0 0
  %85 = vmatprep.subr.bf16.mxu0 0
  %86 = vmatpush1.bf16.msra.mxu0 0
  %87 = vmatprep.subr.bf16.mxu0 0
  %88 = vmatpush1.bf16.msra.mxu0 0
  %89 = vmatprep.subr.bf16.mxu0 0
  %90 = vmatpush1.bf16.msra.mxu0 0
  %91 = vmatprep.subr.bf16.mxu0 0
  %92 = vmatpush1.bf16.msra.mxu0 0
  %93 = vmatprep.subr.bf16.mxu0 0
  %94 = vmatpush1.bf16.msra.mxu0 0
  %95 = vmatprep.subr.bf16.mxu0 0
  %96 = vmatpush1.bf16.msra.mxu0 0
  %97 = vmatprep.mubr.bf16.mxu0 0
  %98 = vmatmul.mubr.bf16.gmra.mrb[0].mxu0 %v59
  %v99 = vpop.f32.mrb[0].mxu0
  %v100 = vadd.f32 %v44, %v99
  %v101 = vpop.f32.mrb[0].mxu0
  %v102 = vpop.f32.mrb[0].mxu0
  %v103 = vpop.f32.mrb[0].mxu0
  %104 = vdwg.mxu0
  %v105 = vmax.f32 %v100, 0.0
  %v106 = vpack.c.bf16 %v105, %v105
  %v107 = vld [vmem:[%s3] sm:$0xf]
  %v108 = vld [vmem:[%s3 + $0x4] sm:$0xf]
  %v109 = vld [vmem:[%s3 + $0x8] sm:$0xf]
  %v110 = vld [vmem:[%s3 + $0xc] sm:$0xf]
  %v111 = vld [vmem:[%s3 + $0x10] sm:$0xf]
  %v112 = vld [vmem:[%s3 + $0x14] sm:$0xf]
  %v113 = vld [vmem:[%s3 + $0x18] sm:$0xf]
  %v114 = vld [vmem:[%s3 + $0x1c] sm:$0xf]
  %v115 = vld [vmem:[%s4] sm:$0x1]
  %v117 = vlaneseq
  %v118 = vshrl.u32 %v117, 7
  %v119 = vsub.s32 0, %v118
  %v120 = vrot.slane %v115, %v119
  %v130 = vunpack.c.l.b16 %v107
  %v131 = vunpack.c.l.b16 %v108
  %v132 = vunpack.c.l.b16 %v109
  %v133 = vunpack.c.l.b16 %v110
  %v134 = vunpack.c.l.b16 %v111
  %v135 = vunpack.c.l.b16 %v112
  %v136 = vunpack.c.l.b16 %v113
  %v137 = vunpack.c.l.b16 %v114
  %v138 = vpack.c.b16 %v131, %v130
  %v139 = vpack.c.b16 %v133, %v132
  %v140 = vpack.c.b16 %v135, %v134
  %v141 = vpack.c.b16 %v137, %v136
  %vm146 = vcmask 523264
  %v148 = vsel %vm146, %v106, 0
  %150 = vmatprep.subr.bf16.mxu0 0
  %151 = vmatpush1.bf16.msra.mxu0 %v138
  %152 = vmatprep.subr.bf16.mxu0 0
  %153 = vmatpush1.bf16.msra.mxu0 %v139
  %154 = vmatprep.subr.bf16.mxu0 0
  %155 = vmatpush1.bf16.msra.mxu0 %v140
  %156 = vmatprep.subr.bf16.mxu0 0
  %157 = vmatpush1.bf16.msra.mxu0 %v141
  %158 = vmatprep.subr.bf16.mxu0 0
  %159 = vmatpush1.bf16.msra.mxu0 0
  %160 = vmatprep.subr.bf16.mxu0 0
  %161 = vmatpush1.bf16.msra.mxu0 0
  %162 = vmatprep.subr.bf16.mxu0 0
  %163 = vmatpush1.bf16.msra.mxu0 0
  %164 = vmatprep.subr.bf16.mxu0 0
  %165 = vmatpush1.bf16.msra.mxu0 0
  %166 = vmatprep.subr.bf16.mxu0 0
  %167 = vmatpush1.bf16.msra.mxu0 0
  %168 = vmatprep.subr.bf16.mxu0 0
  %169 = vmatpush1.bf16.msra.mxu0 0
  %170 = vmatprep.subr.bf16.mxu0 0
  %171 = vmatpush1.bf16.msra.mxu0 0
  %172 = vmatprep.subr.bf16.mxu0 0
  %173 = vmatpush1.bf16.msra.mxu0 0
  %174 = vmatprep.subr.bf16.mxu0 0
  %175 = vmatpush1.bf16.msra.mxu0 0
  %176 = vmatprep.subr.bf16.mxu0 0
  %177 = vmatpush1.bf16.msra.mxu0 0
  %178 = vmatprep.subr.bf16.mxu0 0
  %179 = vmatpush1.bf16.msra.mxu0 0
  %180 = vmatprep.subr.bf16.mxu0 0
  %181 = vmatpush1.bf16.msra.mxu0 0
  %182 = vmatprep.mubr.bf16.mxu0 0
  %183 = vmatmul.mubr.bf16.gmra.mrb[0].mxu0 %v148
  %v184 = vpop.f32.mrb[0].mxu0
  %v185 = vadd.f32 %v120, %v184
  %v186 = vpop.f32.mrb[0].mxu0
  %v187 = vpop.f32.mrb[0].mxu0
  %v188 = vpop.f32.mrb[0].mxu0
  %189 = vdwg.mxu0
  %v190 = vmax.f32 %v185, 0.0
  %v191 = vpack.c.bf16 %v190, %v190
  %v192 = vld [vmem:[%s5] sm:$0xf]
  %v193 = vld [vmem:[%s5 + $0x4] sm:$0xf]
  %v194 = vld [vmem:[%s5 + $0x8] sm:$0xf]
  %v195 = vld [vmem:[%s5 + $0xc] sm:$0xf]
  %v196 = vld [vmem:[%s6] sm:$0x1]
  %v198 = vlaneseq
  %v199 = vshrl.u32 %v198, 7
  %v200 = vsub.s32 0, %v199
  %v201 = vrot.slane %v196, %v200
  %v207 = vunpack.c.l.b16 %v192
  %v208 = vunpack.c.l.b16 %v193
  %v209 = vunpack.c.l.b16 %v194
  %v210 = vunpack.c.l.b16 %v195
  %v211 = vpack.c.b16 %v208, %v207
  %v212 = vpack.c.b16 %v210, %v209
  %vm215 = vcmask 261120
  %v217 = vsel %vm215, %v191, 0
  %219 = vmatprep.subr.bf16.mxu0 0
  %220 = vmatpush1.bf16.msra.mxu0 %v211
  %221 = vmatprep.subr.bf16.mxu0 0
  %222 = vmatpush1.bf16.msra.mxu0 %v212
  %223 = vmatprep.subr.bf16.mxu0 0
  %224 = vmatpush1.bf16.msra.mxu0 0
  %225 = vmatprep.subr.bf16.mxu0 0
  %226 = vmatpush1.bf16.msra.mxu0 0
  %227 = vmatprep.subr.bf16.mxu0 0
  %228 = vmatpush1.bf16.msra.mxu0 0
  %229 = vmatprep.subr.bf16.mxu0 0
  %230 = vmatpush1.bf16.msra.mxu0 0
  %231 = vmatprep.subr.bf16.mxu0 0
  %232 = vmatpush1.bf16.msra.mxu0 0
  %233 = vmatprep.subr.bf16.mxu0 0
  %234 = vmatpush1.bf16.msra.mxu0 0
  %235 = vmatprep.subr.bf16.mxu0 0
  %236 = vmatpush1.bf16.msra.mxu0 0
  %237 = vmatprep.subr.bf16.mxu0 0
  %238 = vmatpush1.bf16.msra.mxu0 0
  %239 = vmatprep.subr.bf16.mxu0 0
  %240 = vmatpush1.bf16.msra.mxu0 0
  %241 = vmatprep.subr.bf16.mxu0 0
  %242 = vmatpush1.bf16.msra.mxu0 0
  %243 = vmatprep.subr.bf16.mxu0 0
  %244 = vmatpush1.bf16.msra.mxu0 0
  %245 = vmatprep.subr.bf16.mxu0 0
  %246 = vmatpush1.bf16.msra.mxu0 0
  %247 = vmatprep.subr.bf16.mxu0 0
  %248 = vmatpush1.bf16.msra.mxu0 0
  %249 = vmatprep.subr.bf16.mxu0 0
  %250 = vmatpush1.bf16.msra.mxu0 0
  %251 = vmatprep.mubr.bf16.mxu0 0
  %252 = vmatmul.mubr.bf16.gmra.mrb[0].mxu0 %v217
  %v253 = vpop.f32.mrb[0].mxu0
  %v254 = vadd.f32 %v201, %v253
  %v255 = vpop.f32.mrb[0].mxu0
  %v256 = vpop.f32.mrb[0].mxu0
  %v257 = vpop.f32.mrb[0].mxu0
  %258 = vdwg.mxu0
  %v259 = vmax.f32 %v254, 0.0
  %v260 = vpack.c.bf16 %v259, %v259
  %v261 = vld [vmem:[%s7] sm:$0xf]
  %v262 = vld [vmem:[%s7 + $0x4] sm:$0xf]
  %v263 = vld [vmem:[%s8] sm:$0x1]
  %v265 = vlaneseq
  %v266 = vshrl.u32 %v265, 7
  %v267 = vsub.s32 0, %v266
  %v268 = vrot.slane %v263, %v267
  %v272 = vunpack.c.l.b16 %v261
  %v273 = vunpack.c.l.b16 %v262
  %v274 = vpack.c.b16 %v273, %v272
  %vm276 = vcmask 130048
  %v278 = vsel %vm276, %v260, 0
  %280 = vmatprep.subr.bf16.mxu0 0
  %281 = vmatpush1.bf16.msra.mxu0 %v274
  %282 = vmatprep.subr.bf16.mxu0 0
  %283 = vmatpush1.bf16.msra.mxu0 0
  %284 = vmatprep.subr.bf16.mxu0 0
  %285 = vmatpush1.bf16.msra.mxu0 0
  %286 = vmatprep.subr.bf16.mxu0 0
  %287 = vmatpush1.bf16.msra.mxu0 0
  %288 = vmatprep.subr.bf16.mxu0 0
  %289 = vmatpush1.bf16.msra.mxu0 0
  %290 = vmatprep.subr.bf16.mxu0 0
  %291 = vmatpush1.bf16.msra.mxu0 0
  %292 = vmatprep.subr.bf16.mxu0 0
  %293 = vmatpush1.bf16.msra.mxu0 0
  %294 = vmatprep.subr.bf16.mxu0 0
  %295 = vmatpush1.bf16.msra.mxu0 0
  %296 = vmatprep.subr.bf16.mxu0 0
  %297 = vmatpush1.bf16.msra.mxu0 0
  %298 = vmatprep.subr.bf16.mxu0 0
  %299 = vmatpush1.bf16.msra.mxu0 0
  %300 = vmatprep.subr.bf16.mxu0 0
  %301 = vmatpush1.bf16.msra.mxu0 0
  %302 = vmatprep.subr.bf16.mxu0 0
  %303 = vmatpush1.bf16.msra.mxu0 0
  %304 = vmatprep.subr.bf16.mxu0 0
  %305 = vmatpush1.bf16.msra.mxu0 0
  %306 = vmatprep.subr.bf16.mxu0 0
  %307 = vmatpush1.bf16.msra.mxu0 0
  %308 = vmatprep.subr.bf16.mxu0 0
  %309 = vmatpush1.bf16.msra.mxu0 0
  %310 = vmatprep.subr.bf16.mxu0 0
  %311 = vmatpush1.bf16.msra.mxu0 0
  %312 = vmatprep.mubr.bf16.mxu0 0
  %313 = vmatmul.mubr.bf16.gmra.mrb[0].mxu0 %v278
  %v314 = vpop.f32.mrb[0].mxu0
  %v315 = vadd.f32 %v268, %v314
  %v316 = vpop.f32.mrb[0].mxu0
  %v317 = vpop.f32.mrb[0].mxu0
  %v318 = vpop.f32.mrb[0].mxu0
  %319 = vdwg.mxu0
  %vm320 = vcmask 15360
  %321 = vst.msk [vmem:[%s9] sm:$0xff] %vm320, %v315
  // Predicated region
  $region38: #{tpu_custom_call.1} parent=0 // pred_check
    _
  $region39: #{tpu_custom_call.1} parent=0 // pred_check_branch
    %323 = sbr.rel (0) target = $region41
  $region40: #{tpu_custom_call.1} parent=0 // pred_region
    _
  $region41: #{tpu_custom_call.1} parent=0 // pred_fallthru
    _
  // Predicated region
  $region42: #{tpu_custom_call.1} parent=0 // pred_check
    _
  $region43: #{tpu_custom_call.1} parent=0 // pred_check_branch
    %325 = sbr.rel (0) target = $region45
  $region44: #{tpu_custom_call.1} parent=0 // pred_region
    _
  $region45: #{tpu_custom_call.1} parent=0 // pred_fallthru
    _

</llo_original>
